<compile_context>
chip_gen: v7x
topology: tpu7x:2x2x1
jax: 0.10.0
libtpu: 0.0.40
codegen_flags: <defaults>
</compile_context>

<pallas_src>
from functools import partial

import jax
import jax.numpy as jnp
from jax.experimental import pallas as pl
from jax.experimental.pallas import tpu as pltpu


def _round_up(x: int, m: int) -> int:
    return ((x + m - 1) // m) * m


def _tpu_vmem_capacity_bytes() -> int:
    """Physical VMEM per core, with conservative fallbacks."""
    try:
        return int(pltpu.get_tpu_info().vmem_capacity_bytes)
    except Exception:
        try:
            kind = jax.devices()[0].device_kind.lower()
        except Exception:
            kind = ""
        if any(v in kind for v in ("v3", "v4", "v5", "v6")):
            return 128 * 1024 * 1024
        return 64 * 1024 * 1024  # v7x / unknown: be conservative


# ----------------------------------------------------------------------------
# Pallas kernel: fused 3-layer MLP (Linear+ReLU, Linear+ReLU, Linear)
# ----------------------------------------------------------------------------
def _mlp_kernel(obs_ref, w1_ref, b1_ref, w2_ref, b2_ref, w3_ref, b3_ref, out_ref):
    # Single on-chip cast: native obs dtype -> bf16 MXU operand (f32 accumulate
    # via preferred_element_type; bias add / ReLU stay f32).
    x = obs_ref[...].astype(jnp.bfloat16)

    h1 = jnp.dot(x, w1_ref[...], preferred_element_type=jnp.float32) + b1_ref[...]
    h1 = jnp.maximum(h1, 0.0)

    h2 = jnp.dot(h1.astype(jnp.bfloat16), w2_ref[...],
                 preferred_element_type=jnp.float32) + b2_ref[...]
    h2 = jnp.maximum(h2, 0.0)

    # True-width output (no padded lanes), f32.
    out_ref[...] = jnp.dot(h2.astype(jnp.bfloat16), w3_ref[...],
                           preferred_element_type=jnp.float32) + b3_ref[...]


def _mlp_pallas(obs, w1, b1, w2, b2, w3, b3, *, tile_b, vmem_limit_bytes):
    Bp, D = obs.shape
    Hp = w1.shape[1]
    O = w3.shape[1]
    # Ragged tail block (Bp % tile_b != 0) is handled by Pallas boundary
    # masking: OOB rows read garbage that only feeds discarded OOB stores.
    grid = (pl.cdiv(Bp, tile_b),)

    # Weights/biases: constant index_map -> fetched once, VMEM-resident across
    # all grid steps.  Single-buffer them when large (BlockSpec inputs default
    # to double buffering, which wastes VMEM on v7x's 64 MiB per TC).
    weight_bytes = sum(a.size * a.dtype.itemsize for a in (w1, b1, w2, b2, w3, b3))
    wkw = dict(pipeline_mode=pl.Buffered(1)) if weight_bytes > (8 << 20) else {}
    # TODO(synk): for hidden sizes too large for VMEM residency, add a
    # K-gridded (reduction-axis) fallback instead of holding full weights.

    return pl.pallas_call(
        _mlp_kernel,
        out_shape=jax.ShapeDtypeStruct((Bp, O), jnp.float32),
        grid=grid,
        in_specs=[
            # obs tile streams per grid step (auto double-buffered).
            pl.BlockSpec((tile_b, D), lambda i: (i, 0)),
            pl.BlockSpec((D, Hp), lambda i: (0, 0), **wkw),
            pl.BlockSpec((1, Hp), lambda i: (0, 0), **wkw),
            pl.BlockSpec((Hp, Hp), lambda i: (0, 0), **wkw),
            pl.BlockSpec((1, Hp), lambda i: (0, 0), **wkw),
            pl.BlockSpec((Hp, O), lambda i: (0, 0), **wkw),
            pl.BlockSpec((1, O), lambda i: (0, 0), **wkw),
        ],
        out_specs=pl.BlockSpec((tile_b, O), lambda i: (i, 0)),
        compiler_params=pltpu.CompilerParams(
            # Batch axis is embarrassingly parallel -> megacore / dual-TC sharding.
            # TODO(synk): on v7x, CORE_PARALLEL / core_map could force an explicit
            # 2-way split if "parallel" alone does not shard across TensorCores.
            dimension_semantics=("parallel",),
            vmem_limit_bytes=vmem_limit_bytes,
        ),
    )(obs, w1, b1, w2, b2, w3, b3)


def _forward(obs, w1, b1, w2, b2, w3, b3, *, tile_cap, vmem_limit_bytes):
    # Net.forward flattens trailing dims: obs.flatten(1)
    obs = obs.reshape(obs.shape[0], -1)
    B = obs.shape[0]

    # Tiny batches only: pad rows to one sublane (8) so the single block never
    # exceeds the array.  Larger batches are NOT padded (no extra HBM pass);
    # the ragged tail block is masked by Pallas.
    Bp = max(B, 8)
    if Bp != B:
        obs = jnp.pad(obs, ((0, Bp - B), (0, 0)))

    # >= 2 grid steps whenever possible so both v7x TensorCores get work,
    # capped per-generation so big batches stream in large HBM-efficient tiles.
    tile_b = min(tile_cap, max(8, _round_up(pl.cdiv(Bp, 2), 8)))

    logits = _mlp_pallas(obs, w1, b1, w2, b2, w3, b3,
                         tile_b=tile_b, vmem_limit_bytes=vmem_limit_bytes)
    return logits[:B] if Bp != B else logits


# ----------------------------------------------------------------------------
# DataParallelNet-equivalent wrapper
# ----------------------------------------------------------------------------
class DataParallelNetPallas:
    """Mirrors DataParallelNet(Net(...)): casts obs to float32 and runs the
    wrapped MLP, returning (logits, state)."""

    def __init__(self, state_dim: int, hidden: int, out_dim: int, key):
        self.out_dim = out_dim
        k1, k2, k3 = jax.random.split(key, 3)

        # nn.Linear-style init (uniform +-1/sqrt(fan_in) for weights AND biases).
        def linear(k, fan_in, fan_out):
            kw, kb = jax.random.split(k)
            bound = 1.0 / (fan_in ** 0.5)
            w = jax.random.uniform(kw, (fan_in, fan_out), jnp.float32, -bound, bound)
            b = jax.random.uniform(kb, (1, fan_out), jnp.float32, -bound, bound)
            return w, b

        w1, b1 = linear(k1, state_dim, hidden)
        w2, b2 = linear(k2, hidden, hidden)
        w3, b3 = linear(k3, hidden, out_dim)

        # Hidden dim padded to a lane multiple (128) -> full-tile MXU issues and
        # lane-dense intermediate layouts; zero-padded rows/cols are inert.
        # Output keeps its true width (kernel writes only real logits, no
        # post-kernel slice).  Flattened obs dim is left unpadded.
        # TODO(synk): if state_dim is large and not a multiple of 128 (e.g.
        # image observations), pad it (and w1's rows) to 128 for lane-dense
        # obs tiles; for tiny state dims padding would inflate HBM traffic.
        Hp = _round_up(hidden, 128)

        def pad_to(a, shape):
            return jnp.pad(a, [(0, s - d) for d, s in zip(a.shape, shape)])

        # Weights in bf16 for the MXU, biases in f32 (f32 accumulate + bias).
        self.w1 = pad_to(w1, (state_dim, Hp)).astype(jnp.bfloat16)
        self.b1 = pad_to(b1, (1, Hp))
        self.w2 = pad_to(w2, (Hp, Hp)).astype(jnp.bfloat16)
        self.b2 = pad_to(b2, (1, Hp))
        self.w3 = pad_to(w3, (Hp, out_dim)).astype(jnp.bfloat16)
        self.b3 = b3

        # Generation-aware tiling / VMEM budget: v5e & v6e have 128 MiB physical
        # VMEM (big tiles, ~100 MiB limit); v7x has 64 MiB per TensorCore
        # (smaller tiles, 48 MiB limit).
        vmem_cap = _tpu_vmem_capacity_bytes()
        if vmem_cap >= 128 * 1024 * 1024:
            tile_cap, vmem_limit = 512, 100 * 1024 * 1024
        else:
            tile_cap, vmem_limit = 256, 48 * 1024 * 1024

        # jit the whole forward (flatten + pallas_call + optional tiny-batch slice).
        self._fwd = jax.jit(partial(_forward, tile_cap=tile_cap,
                                    vmem_limit_bytes=vmem_limit))

    def __call__(self, obs, state=None):
        # DataParallelNet casts obs to float32; here the cast happens on-chip
        # (VPU) so the observation streams over HBM in its native dtype.
        obs = jnp.asarray(obs)
        # TODO(synk): nn.DataParallel's multi-GPU scatter/gather and .cuda()
        # have no Pallas equivalent; the batch grid axis marked "parallel"
        # (TensorCore sharding) stands in for it.
        logits = self._fwd(obs, self.w1, self.b1, self.w2, self.b2,
                           self.w3, self.b3)
        return logits, state


if __name__ == "__main__":
    key = jax.random.PRNGKey(0)
    k_param, k_obs = jax.random.split(key)

    B, D, H, O = 2, 4, 32, 32       # batch, state dim, hidden, output
    net = DataParallelNetPallas(state_dim=D, hidden=H, out_dim=O, key=k_param)

    obs = jax.random.normal(k_obs, (B, D), dtype=jnp.float32)
    logits, state = net(obs)
    jax.block_until_ready(logits)

    # Pure-JAX reference emulating the kernel's bf16-operand / f32-accumulate math.
    x = obs.reshape(B, -1).astype(jnp.bfloat16).astype(jnp.float32)
    h = jnp.maximum(x @ net.w1.astype(jnp.float32) + net.b1, 0.0)
    h = jnp.maximum(h.astype(jnp.bfloat16).astype(jnp.float32)
                    @ net.w2.astype(jnp.float32) + net.b2, 0.0)
    ref = (h.astype(jnp.bfloat16).astype(jnp.float32)
           @ net.w3.astype(jnp.float32) + net.b3)

    assert logits.shape == (B, O)
    assert logits.dtype == jnp.float32
    assert state is None
    assert bool(jnp.all(jnp.isfinite(logits)))
    assert bool(jnp.allclose(logits, ref, rtol=2e-2, atol=2e-2))
    print("KERNEL_OK")
</pallas_src>

<mosaic_0001>
module attributes {stable_mosaic.version = 11 : i64} {
  func.func @_mlp_kernel(%arg0: i32, %arg1: memref<8x4xf32, #tpu.memory_space<vmem>>, %arg2: memref<4x128xbf16, #tpu.memory_space<vmem>>, %arg3: memref<1x128xf32, #tpu.memory_space<vmem>>, %arg4: memref<128x128xbf16, #tpu.memory_space<vmem>>, %arg5: memref<1x128xf32, #tpu.memory_space<vmem>>, %arg6: memref<128x32xbf16, #tpu.memory_space<vmem>>, %arg7: memref<1x32xf32, #tpu.memory_space<vmem>>, %arg8: memref<8x32xf32, #tpu.memory_space<vmem>>) attributes {dimension_semantics = [#tpu.dimension_semantics<parallel>], iteration_bounds = array<i64: 1>, scalar_prefetch = 0 : i64, scratch_operands = 0 : i64, tpu.core_type = #tpu.core_type<tc>, window_params = [{transform_indices = @transform_0, window_bounds = array<i64: 8, 4>}, {pipeline_mode = #tpu.pipeline_mode<synchronous>, transform_indices = @transform_1, window_bounds = array<i64: 4, 128>}, {pipeline_mode = #tpu.pipeline_mode<synchronous>, transform_indices = @transform_2, window_bounds = array<i64: 1, 128>}, {pipeline_mode = #tpu.pipeline_mode<synchronous>, transform_indices = @transform_3, window_bounds = array<i64: 128, 128>}, {pipeline_mode = #tpu.pipeline_mode<synchronous>, transform_indices = @transform_4, window_bounds = array<i64: 1, 128>}, {pipeline_mode = #tpu.pipeline_mode<synchronous>, transform_indices = @transform_5, window_bounds = array<i64: 128, 32>}, {pipeline_mode = #tpu.pipeline_mode<synchronous>, transform_indices = @transform_6, window_bounds = array<i64: 1, 32>}, {transform_indices = @transform_7, window_bounds = array<i64: 8, 32>}]} {
    %c0 = arith.constant 0 : index
    %c0_0 = arith.constant 0 : index
    %0 = vector.load %arg1[%c0, %c0_0] : memref<8x4xf32, #tpu.memory_space<vmem>>, vector<8x4xf32>
    %1 = arith.truncf %0 : vector<8x4xf32> to vector<8x4xbf16>
    %c0_1 = arith.constant 0 : index
    %c0_2 = arith.constant 0 : index
    %2 = vector.load %arg2[%c0_1, %c0_2] : memref<4x128xbf16, #tpu.memory_space<vmem>>, vector<4x128xbf16>
    %cst = arith.constant dense<0.000000e+00> : vector<8x128xf32>
    %3 = tpu.matmul %1, %2, %cst {dimension_numbers = #tpu.dot_dimension_numbers<[1], [0], [0], [1], [0, 0, 1, 1], [], []>} : vector<8x4xbf16>, vector<4x128xbf16>, vector<8x128xf32> -> vector<8x128xf32>
    %c0_3 = arith.constant 0 : index
    %c0_4 = arith.constant 0 : index
    %4 = vector.load %arg3[%c0_3, %c0_4] : memref<1x128xf32, #tpu.memory_space<vmem>>, vector<1x128xf32>
    %5 = vector.broadcast %4 : vector<1x128xf32> to vector<8x128xf32>
    %6 = arith.addf %3, %5 : vector<8x128xf32>
    %cst_5 = arith.constant 0.000000e+00 : f32
    %7 = vector.broadcast %cst_5 : f32 to vector<8x128xf32>
    %8 = arith.maximumf %6, %7 : vector<8x128xf32>
    %9 = arith.truncf %8 : vector<8x128xf32> to vector<8x128xbf16>
    %c0_6 = arith.constant 0 : index
    %c0_7 = arith.constant 0 : index
    %10 = vector.load %arg4[%c0_6, %c0_7] : memref<128x128xbf16, #tpu.memory_space<vmem>>, vector<128x128xbf16>
    %cst_8 = arith.constant dense<0.000000e+00> : vector<8x128xf32>
    %11 = tpu.matmul %9, %10, %cst_8 {dimension_numbers = #tpu.dot_dimension_numbers<[1], [0], [0], [1], [0, 0, 1, 1], [], []>} : vector<8x128xbf16>, vector<128x128xbf16>, vector<8x128xf32> -> vector<8x128xf32>
    %c0_9 = arith.constant 0 : index
    %c0_10 = arith.constant 0 : index
    %12 = vector.load %arg5[%c0_9, %c0_10] : memref<1x128xf32, #tpu.memory_space<vmem>>, vector<1x128xf32>
    %13 = vector.broadcast %12 : vector<1x128xf32> to vector<8x128xf32>
    %14 = arith.addf %11, %13 : vector<8x128xf32>
    %cst_11 = arith.constant 0.000000e+00 : f32
    %15 = vector.broadcast %cst_11 : f32 to vector<8x128xf32>
    %16 = arith.maximumf %14, %15 : vector<8x128xf32>
    %17 = arith.truncf %16 : vector<8x128xf32> to vector<8x128xbf16>
    %c0_12 = arith.constant 0 : index
    %c0_13 = arith.constant 0 : index
    %18 = vector.load %arg6[%c0_12, %c0_13] : memref<128x32xbf16, #tpu.memory_space<vmem>>, vector<128x32xbf16>
    %cst_14 = arith.constant dense<0.000000e+00> : vector<8x32xf32>
    %19 = tpu.matmul %17, %18, %cst_14 {dimension_numbers = #tpu.dot_dimension_numbers<[1], [0], [0], [1], [0, 0, 1, 1], [], []>} : vector<8x128xbf16>, vector<128x32xbf16>, vector<8x32xf32> -> vector<8x32xf32>
    %c0_15 = arith.constant 0 : index
    %c0_16 = arith.constant 0 : index
    %20 = vector.load %arg7[%c0_15, %c0_16] : memref<1x32xf32, #tpu.memory_space<vmem>>, vector<1x32xf32>
    %21 = vector.broadcast %20 : vector<1x32xf32> to vector<8x32xf32>
    %22 = arith.addf %19, %21 : vector<8x32xf32>
    %c0_17 = arith.constant 0 : index
    %c0_18 = arith.constant 0 : index
    %23 = vector.load %arg8[%c0_17, %c0_18] : memref<8x32xf32, #tpu.memory_space<vmem>>, vector<8x32xf32>
    tpu.vector_store %arg8[%c0_17, %c0_18], %22 {strides = array<i32>} : memref<8x32xf32, #tpu.memory_space<vmem>>, vector<8x32xf32>,
    return
  }
  func.func @transform_0(%arg0: i32) -> (i32, i32) {
    %c0_i32 = arith.constant 0 : i32
    %c0_i32_0 = arith.constant 0 : i32
    return %arg0, %c0_i32 : i32, i32
  }
  func.func @transform_1(%arg0: i32) -> (i32, i32) {
    %c0_i32 = arith.constant 0 : i32
    %c0_i32_0 = arith.constant 0 : i32
    %c0_i32_1 = arith.constant 0 : i32
    return %c0_i32, %c0_i32_0 : i32, i32
  }
  func.func @transform_2(%arg0: i32) -> (i32, i32) {
    %c0_i32 = arith.constant 0 : i32
    %c0_i32_0 = arith.constant 0 : i32
    %c0_i32_1 = arith.constant 0 : i32
    return %c0_i32, %c0_i32_0 : i32, i32
  }
  func.func @transform_3(%arg0: i32) -> (i32, i32) {
    %c0_i32 = arith.constant 0 : i32
    %c0_i32_0 = arith.constant 0 : i32
    %c0_i32_1 = arith.constant 0 : i32
    return %c0_i32, %c0_i32_0 : i32, i32
  }
  func.func @transform_4(%arg0: i32) -> (i32, i32) {
    %c0_i32 = arith.constant 0 : i32
    %c0_i32_0 = arith.constant 0 : i32
    %c0_i32_1 = arith.constant 0 : i32
    return %c0_i32, %c0_i32_0 : i32, i32
  }
  func.func @transform_5(%arg0: i32) -> (i32, i32) {
    %c0_i32 = arith.constant 0 : i32
    %c0_i32_0 = arith.constant 0 : i32
    %c0_i32_1 = arith.constant 0 : i32
    return %c0_i32, %c0_i32_0 : i32, i32
  }
  func.func @transform_6(%arg0: i32) -> (i32, i32) {
    %c0_i32 = arith.constant 0 : i32
    %c0_i32_0 = arith.constant 0 : i32
    %c0_i32_1 = arith.constant 0 : i32
    return %c0_i32, %c0_i32_0 : i32, i32
  }
  func.func @transform_7(%arg0: i32) -> (i32, i32) {
    %c0_i32 = arith.constant 0 : i32
    %c0_i32_0 = arith.constant 0 : i32
    return %arg0, %c0_i32 : i32, i32
  }
}

</mosaic_0001>

<llo_original>
// kernel: _forward.1
$region0: #{_forward.1}
  #allocation0 [shape = 'u32[]', space=smem, size = 0x4, offset = 0x4, fixed_abs, tag = 'smem constant byte address 0x4 - core index']
  #allocation1 [shape = 'u32[144,128]{1,0:T(1,128)}', space=vmem, size = 0x12000, scoped, tag = 'internal scratch']
  %s0 = inlined_call_operand.vmem [shape: f32[8,4], index: 0, kind: input, shape index: {}]
  %s1 = inlined_call_operand.vmem [shape: bf16[4,128], index: 1, kind: input, shape index: {}]
  %s2 = inlined_call_operand.vmem [shape: f32[1,128], index: 2, kind: input, shape index: {}]
  %s3 = inlined_call_operand.vmem [shape: bf16[128,128], index: 3, kind: input, shape index: {}]
  %s4 = inlined_call_operand.vmem [shape: f32[1,128], index: 4, kind: input, shape index: {}]
  %s5 = inlined_call_operand.vmem [shape: bf16[128,32], index: 5, kind: input, shape index: {}]
  %s6 = inlined_call_operand.vmem [shape: f32[1,32], index: 6, kind: input, shape index: {}]
  %s7 = inlined_call_operand.vmem [shape: f32[8,32], index: 7, kind: output, shape index: {}]
  %s8 = sld [smem:[#allocation0]]
  $region38: #{_forward.1} parent=0
    _
  %s10 = ssub.s32 1, %s8
  %s11 = scalar_select 0, %s10, %s8
  // Predicated region
  $region2: #{_forward.1} parent=0 // pred_check
    _
  $region3: #{_forward.1} parent=0 // pred_check_branch
    %13 = sbr.rel (0) target = $region5
  $region4: #{_forward.1} parent=0 // pred_region
    _
  $region5: #{_forward.1} parent=0 // pred_fallthru
    _
  // Predicated region
  $region6: #{_forward.1} parent=0 // pred_check
    _
  $region7: #{_forward.1} parent=0 // pred_check_branch
    %15 = sbr.rel (0) target = $region9
  $region8: #{_forward.1} parent=0 // pred_region
    _
  $region9: #{_forward.1} parent=0 // pred_fallthru
    _
  // Predicated region
  $region10: #{_forward.1} parent=0 // pred_check
    _
  $region11: #{_forward.1} parent=0 // pred_check_branch
    %17 = sbr.rel (0) target = $region13
  $region12: #{_forward.1} parent=0 // pred_region
    _
  $region13: #{_forward.1} parent=0 // pred_fallthru
    _
  // Predicated region
  $region14: #{_forward.1} parent=0 // pred_check
    _
  $region15: #{_forward.1} parent=0 // pred_check_branch
    %19 = sbr.rel (0) target = $region17
  $region16: #{_forward.1} parent=0 // pred_region
    _
  $region17: #{_forward.1} parent=0 // pred_fallthru
    _
  // Predicated region
  $region18: #{_forward.1} parent=0 // pred_check
    _
  $region19: #{_forward.1} parent=0 // pred_check_branch
    %21 = sbr.rel (0) target = $region21
  $region20: #{_forward.1} parent=0 // pred_region
    _
  $region21: #{_forward.1} parent=0 // pred_fallthru
    _
  // Predicated region
  $region22: #{_forward.1} parent=0 // pred_check
    _
  $region23: #{_forward.1} parent=0 // pred_check_branch
    %23 = sbr.rel (0) target = $region25
  $region24: #{_forward.1} parent=0 // pred_region
    _
  $region25: #{_forward.1} parent=0 // pred_fallthru
    _
  // Predicated region
  $region26: #{_forward.1} parent=0 // pred_check
    _
  $region27: #{_forward.1} parent=0 // pred_check_branch
    %25 = sbr.rel (0) target = $region29
  $region28: #{_forward.1} parent=0 // pred_region
    _
  $region29: #{_forward.1} parent=0 // pred_fallthru
    _
  %v27 = vld [vmem:[%s0] sm:$0xff]
  %v28 = vpack.c.bf16 %v27, %v27
  %v29 = vld [vmem:[%s1] sm:$0x3]
  %v30 = vld [vmem:[%s2] sm:$0x1]
  %v32 = vlaneseq
  %v33 = vshrl.u32 %v32, 7
  %v34 = vsub.s32 0, %v33
  %v35 = vrot.slane %v30, %v34
  %vm37 = vcmask 31744
  %v39 = vsel %vm37, %v28, 0
  %vm41 = vcmask 1041408
  %v43 = vsel %vm41, %v29, 0
  %45 = vmatprep.subr.bf16.mxu0 0
  %46 = vmatpush1.bf16.msra.mxu0 %v43
  %47 = vmatprep.subr.bf16.mxu0 0
  %48 = vmatpush1.bf16.msra.mxu0 0
  %49 = vmatprep.subr.bf16.mxu0 0
  %50 = vmatpush1.bf16.msra.mxu0 0
  %51 = vmatprep.subr.bf16.mxu0 0
  %52 = vmatpush1.bf16.msra.mxu0 0
  %53 = vmatprep.subr.bf16.mxu0 0
  %54 = vmatpush1.bf16.msra.mxu0 0
  %55 = vmatprep.subr.bf16.mxu0 0
  %56 = vmatpush1.bf16.msra.mxu0 0
  %57 = vmatprep.subr.bf16.mxu0 0
  %58 = vmatpush1.bf16.msra.mxu0 0
  %59 = vmatprep.subr.bf16.mxu0 0
  %60 = vmatpush1.bf16.msra.mxu0 0
  %61 = vmatprep.subr.bf16.mxu0 0
  %62 = vmatpush1.bf16.msra.mxu0 0
  %63 = vmatprep.subr.bf16.mxu0 0
  %64 = vmatpush1.bf16.msra.mxu0 0
  %65 = vmatprep.subr.bf16.mxu0 0
  %66 = vmatpush1.bf16.msra.mxu0 0
  %67 = vmatprep.subr.bf16.mxu0 0
  %68 = vmatpush1.bf16.msra.mxu0 0
  %69 = vmatprep.subr.bf16.mxu0 0
  %70 = vmatpush1.bf16.msra.mxu0 0
  %71 = vmatprep.subr.bf16.mxu0 0
  %72 = vmatpush1.bf16.msra.mxu0 0
  %73 = vmatprep.subr.bf16.mxu0 0
  %74 = vmatpush1.bf16.msra.mxu0 0
  %75 = vmatprep.subr.bf16.mxu0 0
  %76 = vmatpush1.bf16.msra.mxu0 0
  %77 = vmatprep.mubr.bf16.mxu0 0
  %78 = vmatmul.mubr.bf16.gmra.mrb[0].mxu0 %v39
  %v79 = vpop.f32.mrb[0].mxu0
  %v80 = vadd.f32 %v35, %v79
  %v81 = vpop.f32.mrb[0].mxu0
  %v82 = vpop.f32.mrb[0].mxu0
  %v83 = vpop.f32.mrb[0].mxu0
  %84 = vdwg.mxu0
  %v85 = vmax.f32 %v80, 0.0
  %v86 = vpack.c.bf16 %v85, %v85
  %v87 = vld [vmem:[%s3] sm:$0xf]
  %v88 = vld [vmem:[%s3 + $0x4] sm:$0xf]
  %v89 = vld [vmem:[%s3 + $0x8] sm:$0xf]
  %v90 = vld [vmem:[%s3 + $0xc] sm:$0xf]
  %v91 = vld [vmem:[%s3 + $0x10] sm:$0xf]
  %v92 = vld [vmem:[%s3 + $0x14] sm:$0xf]
  %v93 = vld [vmem:[%s3 + $0x18] sm:$0xf]
  %v94 = vld [vmem:[%s3 + $0x1c] sm:$0xf]
  %v95 = vld [vmem:[%s3 + $0x20] sm:$0xf]
  %v96 = vld [vmem:[%s3 + $0x24] sm:$0xf]
  %v97 = vld [vmem:[%s3 + $0x28] sm:$0xf]
  %v98 = vld [vmem:[%s3 + $0x2c] sm:$0xf]
  %v99 = vld [vmem:[%s3 + $0x30] sm:$0xf]
  %v100 = vld [vmem:[%s3 + $0x34] sm:$0xf]
  %v101 = vld [vmem:[%s3 + $0x38] sm:$0xf]
  %v102 = vld [vmem:[%s3 + $0x3c] sm:$0xf]
  %v103 = vld [vmem:[%s4] sm:$0x1]
  %v105 = vlaneseq
  %v106 = vshrl.u32 %v105, 7
  %v107 = vsub.s32 0, %v106
  %v108 = vrot.slane %v103, %v107
  %v126 = vunpack.c.l.b16 %v87
  %v127 = vunpack.c.l.b16 %v88
  %v128 = vunpack.c.l.b16 %v89
  %v129 = vunpack.c.l.b16 %v90
  %v130 = vunpack.c.l.b16 %v91
  %v131 = vunpack.c.l.b16 %v92
  %v132 = vunpack.c.l.b16 %v93
  %v133 = vunpack.c.l.b16 %v94
  %v134 = vunpack.c.l.b16 %v95
  %v135 = vunpack.c.l.b16 %v96
  %v136 = vunpack.c.l.b16 %v97
  %v137 = vunpack.c.l.b16 %v98
  %v138 = vunpack.c.l.b16 %v99
  %v139 = vunpack.c.l.b16 %v100
  %v140 = vunpack.c.l.b16 %v101
  %v141 = vunpack.c.l.b16 %v102
  %v142 = vpack.c.b16 %v127, %v126
  %v143 = vpack.c.b16 %v129, %v128
  %v144 = vpack.c.b16 %v131, %v130
  %v145 = vpack.c.b16 %v133, %v132
  %v146 = vpack.c.b16 %v135, %v134
  %v147 = vpack.c.b16 %v137, %v136
  %v148 = vpack.c.b16 %v139, %v138
  %v149 = vpack.c.b16 %v141, %v140
  %158 = vmatprep.subr.bf16.mxu0 0
  %159 = vmatpush1.bf16.msra.mxu0 %v142
  %160 = vmatprep.subr.bf16.mxu0 0
  %161 = vmatpush1.bf16.msra.mxu0 %v143
  %162 = vmatprep.subr.bf16.mxu0 0
  %163 = vmatpush1.bf16.msra.mxu0 %v144
  %164 = vmatprep.subr.bf16.mxu0 0
  %165 = vmatpush1.bf16.msra.mxu0 %v145
  %166 = vmatprep.subr.bf16.mxu0 0
  %167 = vmatpush1.bf16.msra.mxu0 %v146
  %168 = vmatprep.subr.bf16.mxu0 0
  %169 = vmatpush1.bf16.msra.mxu0 %v147
  %170 = vmatprep.subr.bf16.mxu0 0
  %171 = vmatpush1.bf16.msra.mxu0 %v148
  %172 = vmatprep.subr.bf16.mxu0 0
  %173 = vmatpush1.bf16.msra.mxu0 %v149
  %174 = vmatprep.subr.bf16.mxu0 0
  %175 = vmatpush1.bf16.msra.mxu0 0
  %176 = vmatprep.subr.bf16.mxu0 0
  %177 = vmatpush1.bf16.msra.mxu0 0
  %178 = vmatprep.subr.bf16.mxu0 0
  %179 = vmatpush1.bf16.msra.mxu0 0
  %180 = vmatprep.subr.bf16.mxu0 0
  %181 = vmatpush1.bf16.msra.mxu0 0
  %182 = vmatprep.subr.bf16.mxu0 0
  %183 = vmatpush1.bf16.msra.mxu0 0
  %184 = vmatprep.subr.bf16.mxu0 0
  %185 = vmatpush1.bf16.msra.mxu0 0
  %186 = vmatprep.subr.bf16.mxu0 0
  %187 = vmatpush1.bf16.msra.mxu0 0
  %188 = vmatprep.subr.bf16.mxu0 0
  %189 = vmatpush1.bf16.msra.mxu0 0
  %190 = vmatprep.mubr.bf16.mxu0 0
  %191 = vmatmul.mubr.bf16.gmra.mrb[0].mxu0 %v86
  %v192 = vpop.f32.mrb[0].mxu0
  %v193 = vadd.f32 %v108, %v192
  %v194 = vpop.f32.mrb[0].mxu0
  %v195 = vpop.f32.mrb[0].mxu0
  %v196 = vpop.f32.mrb[0].mxu0
  %197 = vdwg.mxu0
  %v198 = vmax.f32 %v193, 0.0
  %v199 = vpack.c.bf16 %v198, %v198
  %v200 = vld [vmem:[%s5] sm:$0xf]
  %v201 = vld [vmem:[%s5 + $0x4] sm:$0xf]
  %v202 = vld [vmem:[%s5 + $0x8] sm:$0xf]
  %v203 = vld [vmem:[%s5 + $0xc] sm:$0xf]
  %v204 = vld [vmem:[%s5 + $0x10] sm:$0xf]
  %v205 = vld [vmem:[%s5 + $0x14] sm:$0xf]
  %v206 = vld [vmem:[%s5 + $0x18] sm:$0xf]
  %v207 = vld [vmem:[%s5 + $0x1c] sm:$0xf]
  %v208 = vld [vmem:[%s5 + $0x20] sm:$0xf]
  %v209 = vld [vmem:[%s5 + $0x24] sm:$0xf]
  %v210 = vld [vmem:[%s5 + $0x28] sm:$0xf]
  %v211 = vld [vmem:[%s5 + $0x2c] sm:$0xf]
  %v212 = vld [vmem:[%s5 + $0x30] sm:$0xf]
  %v213 = vld [vmem:[%s5 + $0x34] sm:$0xf]
  %v214 = vld [vmem:[%s5 + $0x38] sm:$0xf]
  %v215 = vld [vmem:[%s5 + $0x3c] sm:$0xf]
  %v216 = vld [vmem:[%s6] sm:$0x1]
  %v218 = vlaneseq
  %v219 = vshrl.u32 %v218, 7
  %v220 = vsub.s32 0, %v219
  %v221 = vrot.slane %v216, %v220
  %v239 = vunpack.c.l.b16 %v200
  %v240 = vunpack.c.l.b16 %v201
  %v241 = vunpack.c.l.b16 %v202
  %v242 = vunpack.c.l.b16 %v203
  %v243 = vunpack.c.l.b16 %v204
  %v244 = vunpack.c.l.b16 %v205
  %v245 = vunpack.c.l.b16 %v206
  %v246 = vunpack.c.l.b16 %v207
  %v247 = vunpack.c.l.b16 %v208
  %v248 = vunpack.c.l.b16 %v209
  %v249 = vunpack.c.l.b16 %v210
  %v250 = vunpack.c.l.b16 %v211
  %v251 = vunpack.c.l.b16 %v212
  %v252 = vunpack.c.l.b16 %v213
  %v253 = vunpack.c.l.b16 %v214
  %v254 = vunpack.c.l.b16 %v215
  %v255 = vpack.c.b16 %v240, %v239
  %v256 = vpack.c.b16 %v242, %v241
  %v257 = vpack.c.b16 %v244, %v243
  %v258 = vpack.c.b16 %v246, %v245
  %v259 = vpack.c.b16 %v248, %v247
  %v260 = vpack.c.b16 %v250, %v249
  %v261 = vpack.c.b16 %v252, %v251
  %v262 = vpack.c.b16 %v254, %v253
  %271 = vmatprep.subr.bf16.mxu0 0
  %272 = vmatpush1.bf16.msra.mxu0 %v255
  %273 = vmatprep.subr.bf16.mxu0 0
  %274 = vmatpush1.bf16.msra.mxu0 %v256
  %275 = vmatprep.subr.bf16.mxu0 0
  %276 = vmatpush1.bf16.msra.mxu0 %v257
  %277 = vmatprep.subr.bf16.mxu0 0
  %278 = vmatpush1.bf16.msra.mxu0 %v258
  %279 = vmatprep.subr.bf16.mxu0 0
  %280 = vmatpush1.bf16.msra.mxu0 %v259
  %281 = vmatprep.subr.bf16.mxu0 0
  %282 = vmatpush1.bf16.msra.mxu0 %v260
  %283 = vmatprep.subr.bf16.mxu0 0
  %284 = vmatpush1.bf16.msra.mxu0 %v261
  %285 = vmatprep.subr.bf16.mxu0 0
  %286 = vmatpush1.bf16.msra.mxu0 %v262
  %287 = vmatprep.subr.bf16.mxu0 0
  %288 = vmatpush1.bf16.msra.mxu0 0
  %289 = vmatprep.subr.bf16.mxu0 0
  %290 = vmatpush1.bf16.msra.mxu0 0
  %291 = vmatprep.subr.bf16.mxu0 0
  %292 = vmatpush1.bf16.msra.mxu0 0
  %293 = vmatprep.subr.bf16.mxu0 0
  %294 = vmatpush1.bf16.msra.mxu0 0
  %295 = vmatprep.subr.bf16.mxu0 0
  %296 = vmatpush1.bf16.msra.mxu0 0
  %297 = vmatprep.subr.bf16.mxu0 0
  %298 = vmatpush1.bf16.msra.mxu0 0
  %299 = vmatprep.subr.bf16.mxu0 0
  %300 = vmatpush1.bf16.msra.mxu0 0
  %301 = vmatprep.subr.bf16.mxu0 0
  %302 = vmatpush1.bf16.msra.mxu0 0
  %303 = vmatprep.mubr.bf16.mxu0 0
  %304 = vmatmul.mubr.bf16.gmra.mrb[0].mxu0 %v199
  %v305 = vpop.f32.mrb[0].mxu0
  %v306 = vadd.f32 %v221, %v305
  %v307 = vpop.f32.mrb[0].mxu0
  %v308 = vpop.f32.mrb[0].mxu0
  %v309 = vpop.f32.mrb[0].mxu0
  %310 = vdwg.mxu0
  %vm311 = vcmask 261120
  %312 = vst.msk [vmem:[%s7] sm:$0xff] %vm311, %v306
  // Predicated region
  $region30: #{_forward.1} parent=0 // pred_check
    _
  $region31: #{_forward.1} parent=0 // pred_check_branch
    %314 = sbr.rel (0) target = $region33
  $region32: #{_forward.1} parent=0 // pred_region
    _
  $region33: #{_forward.1} parent=0 // pred_fallthru
    _
  // Predicated region
  $region34: #{_forward.1} parent=0 // pred_check
    _
  $region35: #{_forward.1} parent=0 // pred_check_branch
    %316 = sbr.rel (0) target = $region37
  $region36: #{_forward.1} parent=0 // pred_region
    _
  $region37: #{_forward.1} parent=0 // pred_fallthru
    _

</llo_original>
